<compile_context>
chip_gen: v7x
topology: tpu7x:2x2x1
jax: 0.10.0
libtpu: 0.0.40
codegen_flags: <defaults>
</compile_context>

<pallas_src>
import numpy as np
import jax
import jax.numpy as jnp
from jax.experimental import pallas as pl
from jax.experimental.pallas import tpu as pltpu

ENCODING_DIM = 32
INPUT_DIM = 128
TM_MAX = 1024          # batch-tile rows per grid step


def _round_up(n, m):
    return ((n + m - 1) // m) * m


def haar_wavelet_transform(x):
    """Single-level Haar DWT along the last axis: returns (cA, cD).

    # TODO(synk): original code calls an undefined `wavelet_transform`; we
    # assume pywt.dwt(x, 'haar') semantics (approx/detail coefficients).
    """
    even = x[..., 0::2]
    odd = x[..., 1::2]
    inv_sqrt2 = jnp.float32(1.0 / np.sqrt(2.0))
    cA = (even + odd) * inv_sqrt2
    cD = (even - odd) * inv_sqrt2
    return cA, cD


def _haar_detail_matrix(dim):
    """Constant D of shape (dim, dim//2) such that x @ D == Haar detail coeffs."""
    half = dim // 2
    d = np.zeros((dim, half), dtype=np.float32)
    k = np.arange(half)
    d[2 * k, k] = 1.0 / np.sqrt(2.0)
    d[2 * k + 1, k] = -1.0 / np.sqrt(2.0)
    return jnp.asarray(d)


def _autoencoder_kernel(x_ref,
                        w1_ref, b1_ref, w2_ref, b2_ref,
                        w3_ref, b3_ref, w34_ref, b34_ref, w5_ref, b5_ref,
                        enc_ref, dec_ref):
    x = x_ref[...]                                                     # (TM, 128)

    # ----- encoder (Haar already folded into w1) -----
    h1 = jnp.maximum(
        jnp.dot(x, w1_ref[...], preferred_element_type=jnp.float32) + b1_ref[...],
        0.0)                                                           # (TM, 128)
    h2 = jnp.maximum(
        jnp.dot(h1, w2_ref[...], preferred_element_type=jnp.float32) + b2_ref[...],
        0.0)                                                           # (TM, 128)
    enc = jnp.dot(h2, w3_ref[...], preferred_element_type=jnp.float32) + b3_ref[...]
    enc_ref[...] = enc.astype(enc_ref.dtype)                           # (TM, 32)

    # ----- decoder -----
    # First decoder layer fused with the (linear, no-ReLU) encoder output:
    #   relu(enc @ w4 + b4) == relu(h2 @ (w3 @ w4) + (b3 @ w4 + b4))
    h3 = jnp.maximum(
        jnp.dot(h2, w34_ref[...], preferred_element_type=jnp.float32) + b34_ref[...],
        0.0)                                                           # (TM, 128)
    dec = jnp.dot(h3, w5_ref[...], preferred_element_type=jnp.float32) + b5_ref[...]
    dec_ref[...] = dec.astype(dec_ref.dtype)                           # (TM, 128)


def prepare_kernel_params(params):
    """Fold the Haar transform into w1 and fuse w3@w4 (trace-time, done once)."""
    w1, b1, w2, b2, w3, b3, w4, b4, w5, b5 = params
    d = _haar_detail_matrix(INPUT_DIM)
    w1d = d @ w1                    # (128, 128): x @ w1d == cD(x) @ w1
    w34 = w3 @ w4                   # (128, 128)
    b34 = b3 @ w4 + b4              # (1, 128)
    return (w1d, b1, w2, b2, w3, b3, w34, b34, w5, b5)


def autoencoder_forward(x, kernel_params):
    """x: (N, INPUT_DIM) float32. Returns (encoded (N,32), decoded (N,128))."""
    n = x.shape[0]
    x = x.astype(jnp.float32)

    # Batch tile: big for throughput, shrunk (mult. of 8) for tiny batches.
    tm = min(TM_MAX, _round_up(n, 8))
    n_pad = _round_up(n, tm)
    if n_pad != n:
        x = jnp.pad(x, ((0, n_pad - n), (0, 0)))
    grid = (n_pad // tm,)

    (w1d, b1, w2, b2, w3, b3, w34, b34, w5, b5) = kernel_params

    def resident(arr):
        # Whole array, constant block index -> loaded once, stays in VMEM.
        return pl.BlockSpec(arr.shape, lambda i: (0, 0))

    in_specs = [
        pl.BlockSpec((tm, INPUT_DIM), lambda i: (i, 0)),   # streamed x tile
        resident(w1d), resident(b1),
        resident(w2), resident(b2),
        resident(w3), resident(b3),
        resident(w34), resident(b34),
        resident(w5), resident(b5),
    ]
    out_specs = (
        pl.BlockSpec((tm, ENCODING_DIM), lambda i: (i, 0)),
        pl.BlockSpec((tm, INPUT_DIM), lambda i: (i, 0)),
    )

    # 4 x (128x128) matmuls + 1 x (128x32) matmul per row (post-fusion).
    flops_per_row = 2 * (4 * INPUT_DIM * INPUT_DIM + INPUT_DIM * ENCODING_DIM)
    weight_bytes = sum(int(np.prod(p.shape)) * 4 for p in kernel_params)
    cost = pl.CostEstimate(
        flops=flops_per_row * n_pad,
        transcendentals=0,
        bytes_accessed=n_pad * (2 * INPUT_DIM + ENCODING_DIM) * 4 + weight_bytes,
    )

    encoded, decoded = pl.pallas_call(
        _autoencoder_kernel,
        out_shape=(
            jax.ShapeDtypeStruct((n_pad, ENCODING_DIM), jnp.float32),
            jax.ShapeDtypeStruct((n_pad, INPUT_DIM), jnp.float32),
        ),
        grid=grid,
        in_specs=in_specs,
        out_specs=out_specs,
        compiler_params=pltpu.CompilerParams(
            dimension_semantics=("parallel",),        # megacore split on v7x
            vmem_limit_bytes=32 * 1024 * 1024,        # safe on v5e/v6e/v7x
        ),
        cost_estimate=cost,
    )(x, w1d, b1, w2, b2, w3, b3, w34, b34, w5, b5)

    if n_pad != n:
        encoded = encoded[:n]
        decoded = decoded[:n]
    return encoded, decoded


def init_params(key):
    """Init matching nn.Linear default (U[-1/sqrt(fan_in), 1/sqrt(fan_in)]).

    Weights stored (in_features, out_features); biases as (1, out_features).
    """
    dims = [
        (INPUT_DIM // 2, INPUT_DIM),   # encoder Linear 1: 64 -> 128
        (INPUT_DIM, 128),              # encoder Linear 2: 128 -> 128
        (128, ENCODING_DIM),           # encoder Linear 3: 128 -> 32
        (ENCODING_DIM, 128),           # decoder Linear 1: 32 -> 128
        (128, INPUT_DIM),              # decoder Linear 2: 128 -> 128
    ]
    params = []
    for (fan_in, fan_out) in dims:
        key, kw, kb = jax.random.split(key, 3)
        bound = 1.0 / np.sqrt(float(fan_in))
        w = jax.random.uniform(kw, (fan_in, fan_out), jnp.float32, -bound, bound)
        b = jax.random.uniform(kb, (1, fan_out), jnp.float32, -bound, bound)
        params.extend([w, b])
    return tuple(params)


def ref_forward(x, params):
    """Pure-JAX reference with the original (unfused) math."""
    _, x2 = haar_wavelet_transform(x)
    w1, b1, w2, b2, w3, b3, w4, b4, w5, b5 = params
    h = jnp.maximum(x2 @ w1 + b1, 0.0)
    h = jnp.maximum(h @ w2 + b2, 0.0)
    enc = h @ w3 + b3
    h = jnp.maximum(enc @ w4 + b4, 0.0)
    dec = h @ w5 + b5
    return enc, dec


if __name__ == "__main__":
    key = jax.random.PRNGKey(0)
    key, kx, kx2, kp = jax.random.split(key, 4)

    params = init_params(kp)
    kernel_params = prepare_kernel_params(params)

    # --- small-batch check (single grid step) ---
    batch = 8
    x = jax.random.normal(kx, (batch, INPUT_DIM), dtype=jnp.float32)
    encoded, decoded = autoencoder_forward(x, kernel_params)
    jax.block_until_ready((encoded, decoded))
    assert encoded.shape == (batch, ENCODING_DIM)
    assert decoded.shape == (batch, INPUT_DIM)

    enc_ref, dec_ref = ref_forward(x, params)
    assert jnp.allclose(encoded, enc_ref, atol=1e-3, rtol=1e-3)
    assert jnp.allclose(decoded, dec_ref, atol=1e-3, rtol=1e-3)

    # --- multi-tile check (exercises grid, pipelining, ragged-batch padding) ---
    big_batch = 2560
    xb = jax.random.normal(kx2, (big_batch, INPUT_DIM), dtype=jnp.float32)
    enc_b, dec_b = autoencoder_forward(xb, kernel_params)
    jax.block_until_ready((enc_b, dec_b))
    assert enc_b.shape == (big_batch, ENCODING_DIM)
    assert dec_b.shape == (big_batch, INPUT_DIM)

    enc_br, dec_br = ref_forward(xb, params)
    assert jnp.allclose(enc_b, enc_br, atol=1e-3, rtol=1e-3)
    assert jnp.allclose(dec_b, dec_br, atol=1e-3, rtol=1e-3)

    print("KERNEL_OK")
</pallas_src>

<mosaic_0001>
module attributes {stable_mosaic.version = 11 : i64} {
  func.func @_autoencoder_kernel(%arg0: i32, %arg1: memref<8x128xf32, #tpu.memory_space<vmem>>, %arg2: memref<128x128xf32, #tpu.memory_space<vmem>>, %arg3: memref<1x128xf32, #tpu.memory_space<vmem>>, %arg4: memref<128x128xf32, #tpu.memory_space<vmem>>, %arg5: memref<1x128xf32, #tpu.memory_space<vmem>>, %arg6: memref<128x32xf32, #tpu.memory_space<vmem>>, %arg7: memref<1x32xf32, #tpu.memory_space<vmem>>, %arg8: memref<128x128xf32, #tpu.memory_space<vmem>>, %arg9: memref<1x128xf32, #tpu.memory_space<vmem>>, %arg10: memref<128x128xf32, #tpu.memory_space<vmem>>, %arg11: memref<1x128xf32, #tpu.memory_space<vmem>>, %arg12: memref<8x32xf32, #tpu.memory_space<vmem>>, %arg13: memref<8x128xf32, #tpu.memory_space<vmem>>) attributes {dimension_semantics = [#tpu.dimension_semantics<parallel>], iteration_bounds = array<i64: 1>, scalar_prefetch = 0 : i64, scratch_operands = 0 : i64, tpu.core_type = #tpu.core_type<tc>, window_params = [{transform_indices = @transform_0, window_bounds = array<i64: 8, 128>}, {pipeline_mode = #tpu.pipeline_mode<synchronous>, transform_indices = @transform_1, window_bounds = array<i64: 128, 128>}, {pipeline_mode = #tpu.pipeline_mode<synchronous>, transform_indices = @transform_2, window_bounds = array<i64: 1, 128>}, {pipeline_mode = #tpu.pipeline_mode<synchronous>, transform_indices = @transform_3, window_bounds = array<i64: 128, 128>}, {pipeline_mode = #tpu.pipeline_mode<synchronous>, transform_indices = @transform_4, window_bounds = array<i64: 1, 128>}, {pipeline_mode = #tpu.pipeline_mode<synchronous>, transform_indices = @transform_5, window_bounds = array<i64: 128, 32>}, {pipeline_mode = #tpu.pipeline_mode<synchronous>, transform_indices = @transform_6, window_bounds = array<i64: 1, 32>}, {pipeline_mode = #tpu.pipeline_mode<synchronous>, transform_indices = @transform_7, window_bounds = array<i64: 128, 128>}, {pipeline_mode = #tpu.pipeline_mode<synchronous>, transform_indices = @transform_8, window_bounds = array<i64: 1, 128>}, {pipeline_mode = #tpu.pipeline_mode<synchronous>, transform_indices = @transform_9, window_bounds = array<i64: 128, 128>}, {pipeline_mode = #tpu.pipeline_mode<synchronous>, transform_indices = @transform_10, window_bounds = array<i64: 1, 128>}, {transform_indices = @transform_11, window_bounds = array<i64: 8, 32>}, {transform_indices = @transform_12, window_bounds = array<i64: 8, 128>}]} {
    %c0 = arith.constant 0 : index
    %c0_0 = arith.constant 0 : index
    %0 = vector.load %arg1[%c0, %c0_0] : memref<8x128xf32, #tpu.memory_space<vmem>>, vector<8x128xf32>
    %c0_1 = arith.constant 0 : index
    %c0_2 = arith.constant 0 : index
    %1 = vector.load %arg2[%c0_1, %c0_2] : memref<128x128xf32, #tpu.memory_space<vmem>>, vector<128x128xf32>
    %cst = arith.constant dense<0.000000e+00> : vector<8x128xf32>
    %2 = tpu.matmul %0, %1, %cst {dimension_numbers = #tpu.dot_dimension_numbers<[1], [0], [0], [1], [0, 0, 1, 1], [], []>} : vector<8x128xf32>, vector<128x128xf32>, vector<8x128xf32> -> vector<8x128xf32>
    %c0_3 = arith.constant 0 : index
    %c0_4 = arith.constant 0 : index
    %3 = vector.load %arg3[%c0_3, %c0_4] : memref<1x128xf32, #tpu.memory_space<vmem>>, vector<1x128xf32>
    %4 = vector.broadcast %3 : vector<1x128xf32> to vector<8x128xf32>
    %5 = arith.addf %2, %4 : vector<8x128xf32>
    %cst_5 = arith.constant 0.000000e+00 : f32
    %6 = vector.broadcast %cst_5 : f32 to vector<8x128xf32>
    %7 = arith.maximumf %5, %6 : vector<8x128xf32>
    %c0_6 = arith.constant 0 : index
    %c0_7 = arith.constant 0 : index
    %8 = vector.load %arg4[%c0_6, %c0_7] : memref<128x128xf32, #tpu.memory_space<vmem>>, vector<128x128xf32>
    %cst_8 = arith.constant dense<0.000000e+00> : vector<8x128xf32>
    %9 = tpu.matmul %7, %8, %cst_8 {dimension_numbers = #tpu.dot_dimension_numbers<[1], [0], [0], [1], [0, 0, 1, 1], [], []>} : vector<8x128xf32>, vector<128x128xf32>, vector<8x128xf32> -> vector<8x128xf32>
    %c0_9 = arith.constant 0 : index
    %c0_10 = arith.constant 0 : index
    %10 = vector.load %arg5[%c0_9, %c0_10] : memref<1x128xf32, #tpu.memory_space<vmem>>, vector<1x128xf32>
    %11 = vector.broadcast %10 : vector<1x128xf32> to vector<8x128xf32>
    %12 = arith.addf %9, %11 : vector<8x128xf32>
    %cst_11 = arith.constant 0.000000e+00 : f32
    %13 = vector.broadcast %cst_11 : f32 to vector<8x128xf32>
    %14 = arith.maximumf %12, %13 : vector<8x128xf32>
    %c0_12 = arith.constant 0 : index
    %c0_13 = arith.constant 0 : index
    %15 = vector.load %arg6[%c0_12, %c0_13] : memref<128x32xf32, #tpu.memory_space<vmem>>, vector<128x32xf32>
    %cst_14 = arith.constant dense<0.000000e+00> : vector<8x32xf32>
    %16 = tpu.matmul %14, %15, %cst_14 {dimension_numbers = #tpu.dot_dimension_numbers<[1], [0], [0], [1], [0, 0, 1, 1], [], []>} : vector<8x128xf32>, vector<128x32xf32>, vector<8x32xf32> -> vector<8x32xf32>
    %c0_15 = arith.constant 0 : index
    %c0_16 = arith.constant 0 : index
    %17 = vector.load %arg7[%c0_15, %c0_16] : memref<1x32xf32, #tpu.memory_space<vmem>>, vector<1x32xf32>
    %18 = vector.broadcast %17 : vector<1x32xf32> to vector<8x32xf32>
    %19 = arith.addf %16, %18 : vector<8x32xf32>
    %c0_17 = arith.constant 0 : index
    %c0_18 = arith.constant 0 : index
    %20 = vector.load %arg12[%c0_17, %c0_18] : memref<8x32xf32, #tpu.memory_space<vmem>>, vector<8x32xf32>
    tpu.vector_store %arg12[%c0_17, %c0_18], %19 {strides = array<i32>} : memref<8x32xf32, #tpu.memory_space<vmem>>, vector<8x32xf32>,
    %c0_19 = arith.constant 0 : index
    %c0_20 = arith.constant 0 : index
    %21 = vector.load %arg8[%c0_19, %c0_20] : memref<128x128xf32, #tpu.memory_space<vmem>>, vector<128x128xf32>
    %cst_21 = arith.constant dense<0.000000e+00> : vector<8x128xf32>
    %22 = tpu.matmul %14, %21, %cst_21 {dimension_numbers = #tpu.dot_dimension_numbers<[1], [0], [0], [1], [0, 0, 1, 1], [], []>} : vector<8x128xf32>, vector<128x128xf32>, vector<8x128xf32> -> vector<8x128xf32>
    %c0_22 = arith.constant 0 : index
    %c0_23 = arith.constant 0 : index
    %23 = vector.load %arg9[%c0_22, %c0_23] : memref<1x128xf32, #tpu.memory_space<vmem>>, vector<1x128xf32>
    %24 = vector.broadcast %23 : vector<1x128xf32> to vector<8x128xf32>
    %25 = arith.addf %22, %24 : vector<8x128xf32>
    %cst_24 = arith.constant 0.000000e+00 : f32
    %26 = vector.broadcast %cst_24 : f32 to vector<8x128xf32>
    %27 = arith.maximumf %25, %26 : vector<8x128xf32>
    %c0_25 = arith.constant 0 : index
    %c0_26 = arith.constant 0 : index
    %28 = vector.load %arg10[%c0_25, %c0_26] : memref<128x128xf32, #tpu.memory_space<vmem>>, vector<128x128xf32>
    %cst_27 = arith.constant dense<0.000000e+00> : vector<8x128xf32>
    %29 = tpu.matmul %27, %28, %cst_27 {dimension_numbers = #tpu.dot_dimension_numbers<[1], [0], [0], [1], [0, 0, 1, 1], [], []>} : vector<8x128xf32>, vector<128x128xf32>, vector<8x128xf32> -> vector<8x128xf32>
    %c0_28 = arith.constant 0 : index
    %c0_29 = arith.constant 0 : index
    %30 = vector.load %arg11[%c0_28, %c0_29] : memref<1x128xf32, #tpu.memory_space<vmem>>, vector<1x128xf32>
    %31 = vector.broadcast %30 : vector<1x128xf32> to vector<8x128xf32>
    %32 = arith.addf %29, %31 : vector<8x128xf32>
    %c0_30 = arith.constant 0 : index
    %c0_31 = arith.constant 0 : index
    %33 = vector.load %arg13[%c0_30, %c0_31] : memref<8x128xf32, #tpu.memory_space<vmem>>, vector<8x128xf32>
    tpu.vector_store %arg13[%c0_30, %c0_31], %32 {strides = array<i32>} : memref<8x128xf32, #tpu.memory_space<vmem>>, vector<8x128xf32>,
    return
  }
  func.func @transform_0(%arg0: i32) -> (i32, i32) {
    %c0_i32 = arith.constant 0 : i32
    %c0_i32_0 = arith.constant 0 : i32
    return %arg0, %c0_i32 : i32, i32
  }
  func.func @transform_1(%arg0: i32) -> (i32, i32) {
    %c0_i32 = arith.constant 0 : i32
    %c0_i32_0 = arith.constant 0 : i32
    %c0_i32_1 = arith.constant 0 : i32
    return %c0_i32, %c0_i32_0 : i32, i32
  }
  func.func @transform_2(%arg0: i32) -> (i32, i32) {
    %c0_i32 = arith.constant 0 : i32
    %c0_i32_0 = arith.constant 0 : i32
    %c0_i32_1 = arith.constant 0 : i32
    return %c0_i32, %c0_i32_0 : i32, i32
  }
  func.func @transform_3(%arg0: i32) -> (i32, i32) {
    %c0_i32 = arith.constant 0 : i32
    %c0_i32_0 = arith.constant 0 : i32
    %c0_i32_1 = arith.constant 0 : i32
    return %c0_i32, %c0_i32_0 : i32, i32
  }
  func.func @transform_4(%arg0: i32) -> (i32, i32) {
    %c0_i32 = arith.constant 0 : i32
    %c0_i32_0 = arith.constant 0 : i32
    %c0_i32_1 = arith.constant 0 : i32
    return %c0_i32, %c0_i32_0 : i32, i32
  }
  func.func @transform_5(%arg0: i32) -> (i32, i32) {
    %c0_i32 = arith.constant 0 : i32
    %c0_i32_0 = arith.constant 0 : i32
    %c0_i32_1 = arith.constant 0 : i32
    return %c0_i32, %c0_i32_0 : i32, i32
  }
  func.func @transform_6(%arg0: i32) -> (i32, i32) {
    %c0_i32 = arith.constant 0 : i32
    %c0_i32_0 = arith.constant 0 : i32
    %c0_i32_1 = arith.constant 0 : i32
    return %c0_i32, %c0_i32_0 : i32, i32
  }
  func.func @transform_7(%arg0: i32) -> (i32, i32) {
    %c0_i32 = arith.constant 0 : i32
    %c0_i32_0 = arith.constant 0 : i32
    %c0_i32_1 = arith.constant 0 : i32
    return %c0_i32, %c0_i32_0 : i32, i32
  }
  func.func @transform_8(%arg0: i32) -> (i32, i32) {
    %c0_i32 = arith.constant 0 : i32
    %c0_i32_0 = arith.constant 0 : i32
    %c0_i32_1 = arith.constant 0 : i32
    return %c0_i32, %c0_i32_0 : i32, i32
  }
  func.func @transform_9(%arg0: i32) -> (i32, i32) {
    %c0_i32 = arith.constant 0 : i32
    %c0_i32_0 = arith.constant 0 : i32
    %c0_i32_1 = arith.constant 0 : i32
    return %c0_i32, %c0_i32_0 : i32, i32
  }
  func.func @transform_10(%arg0: i32) -> (i32, i32) {
    %c0_i32 = arith.constant 0 : i32
    %c0_i32_0 = arith.constant 0 : i32
    %c0_i32_1 = arith.constant 0 : i32
    return %c0_i32, %c0_i32_0 : i32, i32
  }
  func.func @transform_11(%arg0: i32) -> (i32, i32) {
    %c0_i32 = arith.constant 0 : i32
    %c0_i32_0 = arith.constant 0 : i32
    return %arg0, %c0_i32 : i32, i32
  }
  func.func @transform_12(%arg0: i32) -> (i32, i32) {
    %c0_i32 = arith.constant 0 : i32
    %c0_i32_0 = arith.constant 0 : i32
    return %arg0, %c0_i32 : i32, i32
  }
}

</mosaic_0001>

<llo_original>
// kernel: tpu_custom_call.1
$region0: #{tpu_custom_call.1}
  #allocation0 [shape = 'u32[]', space=smem, size = 0x4, offset = 0x4, fixed_abs, tag = 'smem constant byte address 0x4 - core index']
  #allocation1 [shape = 'u32[144,128]{1,0:T(1,128)}', space=vmem, size = 0x12000, scoped, tag = 'internal scratch']
  %s0 = inlined_call_operand.vmem [shape: f32[8,128], index: 0, kind: input, shape index: {}]
  %s1 = inlined_call_operand.vmem [shape: f32[128,128], index: 1, kind: input, shape index: {}]
  %s2 = inlined_call_operand.vmem [shape: f32[1,128], index: 2, kind: input, shape index: {}]
  %s3 = inlined_call_operand.hbm [shape: f32[128,128], index: 3, kind: input, shape index: {}]
  %s4 = inlined_call_operand.vmem [shape: f32[1,128], index: 4, kind: input, shape index: {}]
  %s5 = inlined_call_operand.vmem [shape: f32[128,32], index: 5, kind: input, shape index: {}]
  %s6 = inlined_call_operand.vmem [shape: f32[1,32], index: 6, kind: input, shape index: {}]
  %s7 = inlined_call_operand.hbm [shape: f32[128,128], index: 7, kind: input, shape index: {}]
  %s8 = inlined_call_operand.vmem [shape: f32[1,128], index: 8, kind: input, shape index: {}]
  %s9 = inlined_call_operand.hbm [shape: f32[128,128], index: 9, kind: input, shape index: {}]
  %s10 = inlined_call_operand.vmem [shape: f32[1,128], index: 10, kind: input, shape index: {}]
  %s11 = inlined_call_operand.hbm [shape: f32[8,32], index: 11, kind: output, shape index: {0}]
  %s12 = inlined_call_operand.hbm [shape: f32[8,128], index: 12, kind: output, shape index: {1}]
  %13 = xla_tuple %s11, %s12
  %s14 = sld [smem:[#allocation0]]
  $region74: #{tpu_custom_call.1} parent=0
    _
  %s16 = ssub.s32 1, %s14
  %s17 = scalar_select 0, %s16, %s14
  $region1: #{tpu_custom_call.1} parent=0
    #allocation2 [shape = 'u8[65536]{0}', space=vmem, size = 0x10000, scoped, tag = 'input window, operand 3, single buffered']
    #allocation3 [shape = 's32[1]{0}', space=sflag, size = 0x4, scoped, tag = 'scoped memory for tpu_custom_call.1']
    #allocation4 [shape = 's32[1]{0}', space=sflag, size = 0x4, scoped, tag = 'scoped memory for tpu_custom_call.1']
    #allocation5 [shape = 'u8[65536]{0}', space=vmem, size = 0x10000, scoped, tag = 'input window, operand 7, single buffered']
    #allocation6 [shape = 's32[1]{0}', space=sflag, size = 0x4, scoped, tag = 'scoped memory for tpu_custom_call.1']
    #allocation7 [shape = 'u8[65536]{0}', space=vmem, size = 0x10000, scoped, tag = 'input window, operand 9, single buffered']
    #allocation8 [shape = 'u8[4096]{0}', space=vmem, size = 0x1000, scoped, tag = 'output window, operand 0, single buffered']
    #allocation9 [shape = 'u8[4096]{0}', space=vmem, size = 0x1000, scoped, tag = 'output window, operand 1, single buffered']
    #allocation10 [shape = 's32[1]{0}', space=sflag, size = 0x4, scoped, tag = 'scoped memory for tpu_custom_call.1']
    %18 = vsyncpa [#allocation3], 0
    %19 = vsyncpa [#allocation6], 0
    %20 = vsyncpa [#allocation4], 0
    %21 = vsyncpa [#allocation10], 0
    // Predicated region
    $region2: #{tpu_custom_call.1} parent=1 // pred_check
      _
    $region3: #{tpu_custom_call.1} parent=1 // pred_check_branch
      %23 = sbr.rel (0) target = $region5
    $region4: #{tpu_custom_call.1} parent=1 // pred_region
      _
    $region5: #{tpu_custom_call.1} parent=1 // pred_fallthru
      _
    // Predicated region
    $region6: #{tpu_custom_call.1} parent=1 // pred_check
      _
    $region7: #{tpu_custom_call.1} parent=1 // pred_check_branch
      %25 = sbr.rel (0) target = $region9
    $region8: #{tpu_custom_call.1} parent=1 // pred_region
      _
    $region9: #{tpu_custom_call.1} parent=1 // pred_fallthru
      _
    // Predicated region
    $region10: #{tpu_custom_call.1} parent=1 // pred_check
      _
    $region11: #{tpu_custom_call.1} parent=1 // pred_check_branch
      %27 = sbr.rel (0) target = $region13
    $region12: #{tpu_custom_call.1} parent=1 // pred_region
      _
    $region13: #{tpu_custom_call.1} parent=1 // pred_fallthru
      _
    // Predicated region
    $region14: #{tpu_custom_call.1} parent=1 // pred_check
      _
    $region15: #{tpu_custom_call.1} parent=1 // pred_check_branch
      %29 = sbr.rel (0) target = $region17
    $region16: #{tpu_custom_call.1} parent=1 // pred_region
      %s31 = ssub.s32 2048, 2048
      %32 = vsyncadd [#allocation3], %s31
      %s33 = sshll.u32 [#allocation2], 4
      %s34 = int_to_ptr.vmem [resolvable:$true] %s33
      %39 = dma.hbm_to_vmem [thread:$0]  %s3, 2048, %s34, [#allocation3], 128, 128, 8
    $region17: #{tpu_custom_call.1} parent=1 // pred_fallthru
      _
    // Predicated region
    $region18: #{tpu_custom_call.1} parent=1 // pred_check
      _
    $region19: #{tpu_custom_call.1} parent=1 // pred_check_branch
      %41 = sbr.rel (0) target = $region21
    $region20: #{tpu_custom_call.1} parent=1 // pred_region
      _
    $region21: #{tpu_custom_call.1} parent=1 // pred_fallthru
      _
    // Predicated region
    $region22: #{tpu_custom_call.1} parent=1 // pred_check
      _
    $region23: #{tpu_custom_call.1} parent=1 // pred_check_branch
      %43 = sbr.rel (0) target = $region25
    $region24: #{tpu_custom_call.1} parent=1 // pred_region
      _
    $region25: #{tpu_custom_call.1} parent=1 // pred_fallthru
      _
    // Predicated region
    $region26: #{tpu_custom_call.1} parent=1 // pred_check
      _
    $region27: #{tpu_custom_call.1} parent=1 // pred_check_branch
      %45 = sbr.rel (0) target = $region29
    $region28: #{tpu_custom_call.1} parent=1 // pred_region
      _
    $region29: #{tpu_custom_call.1} parent=1 // pred_fallthru
      _
    // Predicated region
    $region30: #{tpu_custom_call.1} parent=1 // pred_check
      _
    $region31: #{tpu_custom_call.1} parent=1 // pred_check_branch
      %47 = sbr.rel (0) target = $region33
    $region32: #{tpu_custom_call.1} parent=1 // pred_region
      %s49 = ssub.s32 2048, 2048
      %50 = vsyncadd [#allocation6], %s49
      %s51 = sshll.u32 [#allocation5], 4
      %s52 = int_to_ptr.vmem [resolvable:$true] %s51
      %57 = dma.hbm_to_vmem [thread:$0]  %s7, 2048, %s52, [#allocation6], 128, 128, 8
    $region33: #{tpu_custom_call.1} parent=1 // pred_fallthru
      _
    // Predicated region
    $region34: #{tpu_custom_call.1} parent=1 // pred_check
      _
    $region35: #{tpu_custom_call.1} parent=1 // pred_check_branch
      %59 = sbr.rel (0) target = $region37
    $region36: #{tpu_custom_call.1} parent=1 // pred_region
      _
    $region37: #{tpu_custom_call.1} parent=1 // pred_fallthru
      _
    // Predicated region
    $region38: #{tpu_custom_call.1} parent=1 // pred_check
      _
    $region39: #{tpu_custom_call.1} parent=1 // pred_check_branch
      %61 = sbr.rel (0) target = $region41
    $region40: #{tpu_custom_call.1} parent=1 // pred_region
      %s63 = ssub.s32 2048, 2048
      %64 = vsyncadd [#allocation6], %s63
      %s65 = sshll.u32 [#allocation7], 4
      %s66 = int_to_ptr.vmem [resolvable:$true] %s65
      %71 = dma.hbm_to_vmem [thread:$0]  %s9, 2048, %s66, [#allocation6], 128, 128, 8
    $region41: #{tpu_custom_call.1} parent=1 // pred_fallthru
      _
    // Predicated region
    $region42: #{tpu_custom_call.1} parent=1 // pred_check
      _
    $region43: #{tpu_custom_call.1} parent=1 // pred_check_branch
      %73 = sbr.rel (0) target = $region45
    $region44: #{tpu_custom_call.1} parent=1 // pred_region
      _
    $region45: #{tpu_custom_call.1} parent=1 // pred_fallthru
      _
    // Predicated region
    $region46: #{tpu_custom_call.1} parent=1 // pred_check
      _
    $region47: #{tpu_custom_call.1} parent=1 // pred_check_branch
      %75 = sbr.rel (0) target = $region49
    $region48: #{tpu_custom_call.1} parent=1 // pred_region
      %76 = dma.done [#allocation3], 2048
    $region49: #{tpu_custom_call.1} parent=1 // pred_fallthru
      _
    // Predicated region
    $region50: #{tpu_custom_call.1} parent=1 // pred_check
      _
    $region51: #{tpu_custom_call.1} parent=1 // pred_check_branch
      %78 = sbr.rel (0) target = $region53
    $region52: #{tpu_custom_call.1} parent=1 // pred_region
      %79 = dma.done [#allocation6], 2048
    $region53: #{tpu_custom_call.1} parent=1 // pred_fallthru
      _
    // Predicated region
    $region54: #{tpu_custom_call.1} parent=1 // pred_check
      _
    $region55: #{tpu_custom_call.1} parent=1 // pred_check_branch
      %81 = sbr.rel (0) target = $region57
    $region56: #{tpu_custom_call.1} parent=1 // pred_region
      %82 = dma.done [#allocation6], 2048
    $region57: #{tpu_custom_call.1} parent=1 // pred_fallthru
      _
    %v83 = vld [vmem:[%s0] sm:$0xff]
    %v84 = vld [vmem:[%s1] sm:$0xff]
    %v85 = vld [vmem:[%s1 + $0x8] sm:$0xff]
    %v86 = vld [vmem:[%s1 + $0x10] sm:$0xff]
    %v87 = vld [vmem:[%s1 + $0x18] sm:$0xff]
    %v88 = vld [vmem:[%s1 + $0x20] sm:$0xff]
    %v89 = vld [vmem:[%s1 + $0x28] sm:$0xff]
    %v90 = vld [vmem:[%s1 + $0x30] sm:$0xff]
    %v91 = vld [vmem:[%s1 + $0x38] sm:$0xff]
    %v92 = vld [vmem:[%s1 + $0x40] sm:$0xff]
    %v93 = vld [vmem:[%s1 + $0x48] sm:$0xff]
    %v94 = vld [vmem:[%s1 + $0x50] sm:$0xff]
    %v95 = vld [vmem:[%s1 + $0x58] sm:$0xff]
    %v96 = vld [vmem:[%s1 + $0x60] sm:$0xff]
    %v97 = vld [vmem:[%s1 + $0x68] sm:$0xff]
    %v98 = vld [vmem:[%s1 + $0x70] sm:$0xff]
    %v99 = vld [vmem:[%s1 + $0x78] sm:$0xff]
    %v100 = vld [vmem:[%s2] sm:$0x1]
    %v102 = vlaneseq
    %v103 = vshrl.u32 %v102, 7
    %v104 = vsub.s32 0, %v103
    %v105 = vrot.slane %v100, %v104
    %107 = vmatprep.subr.mxu0 0.0
    %108 = vmatpush1.msra.mxu0 %v84
    %109 = vmatprep.subr.mxu0 0.0
    %110 = vmatpush1.msra.mxu0 %v85
    %111 = vmatprep.subr.mxu0 0.0
    %112 = vmatpush1.msra.mxu0 %v86
    %113 = vmatprep.subr.mxu0 0.0
    %114 = vmatpush1.msra.mxu0 %v87
    %115 = vmatprep.subr.mxu0 0.0
    %116 = vmatpush1.msra.mxu0 %v88
    %117 = vmatprep.subr.mxu0 0.0
    %118 = vmatpush1.msra.mxu0 %v89
    %119 = vmatprep.subr.mxu0 0.0
    %120 = vmatpush1.msra.mxu0 %v90
    %121 = vmatprep.subr.mxu0 0.0
    %122 = vmatpush1.msra.mxu0 %v91
    %123 = vmatprep.subr.mxu0 0.0
    %124 = vmatpush1.msra.mxu0 %v92
    %125 = vmatprep.subr.mxu0 0.0
    %126 = vmatpush1.msra.mxu0 %v93
    %127 = vmatprep.subr.mxu0 0.0
    %128 = vmatpush1.msra.mxu0 %v94
    %129 = vmatprep.subr.mxu0 0.0
    %130 = vmatpush1.msra.mxu0 %v95
    %131 = vmatprep.subr.mxu0 0.0
    %132 = vmatpush1.msra.mxu0 %v96
    %133 = vmatprep.subr.mxu0 0.0
    %134 = vmatpush1.msra.mxu0 %v97
    %135 = vmatprep.subr.mxu0 0.0
    %136 = vmatpush1.msra.mxu0 %v98
    %137 = vmatprep.subr.mxu0 0.0
    %138 = vmatpush1.msra.mxu0 %v99
    %139 = vmatprep.subr.mxu0 0.0
    %140 = vmatpush1.msra.mxu0 0.0
    %141 = vmatprep.subr.mxu0 0.0
    %142 = vmatpush1.msra.mxu0 0.0
    %143 = vmatprep.subr.mxu0 0.0
    %144 = vmatpush1.msra.mxu0 0.0
    %145 = vmatprep.subr.mxu0 0.0
    %146 = vmatpush1.msra.mxu0 0.0
    %147 = vmatprep.subr.mxu0 0.0
    %148 = vmatpush1.msra.mxu0 0.0
    %149 = vmatprep.subr.mxu0 0.0
    %150 = vmatpush1.msra.mxu0 0.0
    %151 = vmatprep.subr.mxu0 0.0
    %152 = vmatpush1.msra.mxu0 0.0
    %153 = vmatprep.subr.mxu0 0.0
    %154 = vmatpush1.msra.mxu0 0.0
    %155 = vmatprep.subr.mxu0 0.0
    %156 = vmatpush1.msra.mxu0 0.0
    %157 = vmatprep.subr.mxu0 0.0
    %158 = vmatpush1.msra.mxu0 0.0
    %159 = vmatprep.subr.mxu0 0.0
    %160 = vmatpush1.msra.mxu0 0.0
    %161 = vmatprep.subr.mxu0 0.0
    %162 = vmatpush1.msra.mxu0 0.0
    %163 = vmatprep.subr.mxu0 0.0
    %164 = vmatpush1.msra.mxu0 0.0
    %165 = vmatprep.subr.mxu0 0.0
    %166 = vmatpush1.msra.mxu0 0.0
    %167 = vmatprep.subr.mxu0 0.0
    %168 = vmatpush1.msra.mxu0 0.0
    %169 = vmatprep.subr.mxu0 0.0
    %170 = vmatpush1.msra.mxu0 0.0
    %171 = vmatprep.mubr.f32.mxu0 0.0
    %172 = vmatmul.mubr.f32.gmra.mrb[0].mxu0 %v83
    %v173 = vpop.f32.mrb[0].mxu0
    %v174 = vadd.f32 %v105, %v173
    %v175 = vpop.f32.mrb[0].mxu0
    %176 = vdwg.mxu0
    %v177 = vmax.f32 %v174, 0.0
    %v178 = vld [vmem:[#allocation2] sm:$0xff]
    %v179 = vld [vmem:[#allocation2 + $0x8] sm:$0xff]
    %v180 = vld [vmem:[#allocation2 + $0x10] sm:$0xff]
    %v181 = vld [vmem:[#allocation2 + $0x18] sm:$0xff]
    %v182 = vld [vmem:[#allocation2 + $0x20] sm:$0xff]
    %v183 = vld [vmem:[#allocation2 + $0x28] sm:$0xff]
    %v184 = vld [vmem:[#allocation2 + $0x30] sm:$0xff]
    %v185 = vld [vmem:[#allocation2 + $0x38] sm:$0xff]
    %v186 = vld [vmem:[#allocation2 + $0x40] sm:$0xff]
    %v187 = vld [vmem:[#allocation2 + $0x48] sm:$0xff]
    %v188 = vld [vmem:[#allocation2 + $0x50] sm:$0xff]
    %v189 = vld [vmem:[#allocation2 + $0x58] sm:$0xff]
    %v190 = vld [vmem:[#allocation2 + $0x60] sm:$0xff]
    %v191 = vld [vmem:[#allocation2 + $0x68] sm:$0xff]
    %v192 = vld [vmem:[#allocation2 + $0x70] sm:$0xff]
    %v193 = vld [vmem:[#allocation2 + $0x78] sm:$0xff]
    %v194 = vld [vmem:[%s4] sm:$0x1]
    %v196 = vlaneseq
    %v197 = vshrl.u32 %v196, 7
    %v198 = vsub.s32 0, %v197
    %v199 = vrot.slane %v194, %v198
    %201 = vmatprep.subr.mxu0 0.0
    %202 = vmatpush1.msra.mxu0 %v178
    %203 = vmatprep.subr.mxu0 0.0
    %204 = vmatpush1.msra.mxu0 %v179
    %205 = vmatprep.subr.mxu0 0.0
    %206 = vmatpush1.msra.mxu0 %v180
    %207 = vmatprep.subr.mxu0 0.0
    %208 = vmatpush1.msra.mxu0 %v181
    %209 = vmatprep.subr.mxu0 0.0
    %210 = vmatpush1.msra.mxu0 %v182
    %211 = vmatprep.subr.mxu0 0.0
    %212 = vmatpush1.msra.mxu0 %v183
    %213 = vmatprep.subr.mxu0 0.0
    %214 = vmatpush1.msra.mxu0 %v184
    %215 = vmatprep.subr.mxu0 0.0
    %216 = vmatpush1.msra.mxu0 %v185
    %217 = vmatprep.subr.mxu0 0.0
    %218 = vmatpush1.msra.mxu0 %v186
    %219 = vmatprep.subr.mxu0 0.0
    %220 = vmatpush1.msra.mxu0 %v187
    %221 = vmatprep.subr.mxu0 0.0
    %222 = vmatpush1.msra.mxu0 %v188
    %223 = vmatprep.subr.mxu0 0.0
    %224 = vmatpush1.msra.mxu0 %v189
    %225 = vmatprep.subr.mxu0 0.0
    %226 = vmatpush1.msra.mxu0 %v190
    %227 = vmatprep.subr.mxu0 0.0
    %228 = vmatpush1.msra.mxu0 %v191
    %229 = vmatprep.subr.mxu0 0.0
    %230 = vmatpush1.msra.mxu0 %v192
    %231 = vmatprep.subr.mxu0 0.0
    %232 = vmatpush1.msra.mxu0 %v193
    %233 = vmatprep.subr.mxu0 0.0
    %234 = vmatpush1.msra.mxu0 0.0
    %235 = vmatprep.subr.mxu0 0.0
    %236 = vmatpush1.msra.mxu0 0.0
    %237 = vmatprep.subr.mxu0 0.0
    %238 = vmatpush1.msra.mxu0 0.0
    %239 = vmatprep.subr.mxu0 0.0
    %240 = vmatpush1.msra.mxu0 0.0
    %241 = vmatprep.subr.mxu0 0.0
    %242 = vmatpush1.msra.mxu0 0.0
    %243 = vmatprep.subr.mxu0 0.0
    %244 = vmatpush1.msra.mxu0 0.0
    %245 = vmatprep.subr.mxu0 0.0
    %246 = vmatpush1.msra.mxu0 0.0
    %247 = vmatprep.subr.mxu0 0.0
    %248 = vmatpush1.msra.mxu0 0.0
    %249 = vmatprep.subr.mxu0 0.0
    %250 = vmatpush1.msra.mxu0 0.0
    %251 = vmatprep.subr.mxu0 0.0
    %252 = vmatpush1.msra.mxu0 0.0
    %253 = vmatprep.subr.mxu0 0.0
    %254 = vmatpush1.msra.mxu0 0.0
    %255 = vmatprep.subr.mxu0 0.0
    %256 = vmatpush1.msra.mxu0 0.0
    %257 = vmatprep.subr.mxu0 0.0
    %258 = vmatpush1.msra.mxu0 0.0
    %259 = vmatprep.subr.mxu0 0.0
    %260 = vmatpush1.msra.mxu0 0.0
    %261 = vmatprep.subr.mxu0 0.0
    %262 = vmatpush1.msra.mxu0 0.0
    %263 = vmatprep.subr.mxu0 0.0
    %264 = vmatpush1.msra.mxu0 0.0
    %265 = vmatprep.mubr.f32.mxu0 0.0
    %266 = vmatmul.mubr.f32.gmra.mrb[0].mxu0 %v177
    %v267 = vpop.f32.mrb[0].mxu0
    %v268 = vadd.f32 %v199, %v267
    %v269 = vpop.f32.mrb[0].mxu0
    %270 = vdwg.mxu0
    %v271 = vmax.f32 %v268, 0.0
    %v272 = vld [vmem:[%s5] sm:$0xff]
    %v273 = vld [vmem:[%s5 + $0x8] sm:$0xff]
    %v274 = vld [vmem:[%s5 + $0x10] sm:$0xff]
    %v275 = vld [vmem:[%s5 + $0x18] sm:$0xff]
    %v276 = vld [vmem:[%s5 + $0x20] sm:$0xff]
    %v277 = vld [vmem:[%s5 + $0x28] sm:$0xff]
    %v278 = vld [vmem:[%s5 + $0x30] sm:$0xff]
    %v279 = vld [vmem:[%s5 + $0x38] sm:$0xff]
    %v280 = vld [vmem:[%s5 + $0x40] sm:$0xff]
    %v281 = vld [vmem:[%s5 + $0x48] sm:$0xff]
    %v282 = vld [vmem:[%s5 + $0x50] sm:$0xff]
    %v283 = vld [vmem:[%s5 + $0x58] sm:$0xff]
    %v284 = vld [vmem:[%s5 + $0x60] sm:$0xff]
    %v285 = vld [vmem:[%s5 + $0x68] sm:$0xff]
    %v286 = vld [vmem:[%s5 + $0x70] sm:$0xff]
    %v287 = vld [vmem:[%s5 + $0x78] sm:$0xff]
    %v288 = vld [vmem:[%s6] sm:$0x1]
    %v290 = vlaneseq
    %v291 = vshrl.u32 %v290, 7
    %v292 = vsub.s32 0, %v291
    %v293 = vrot.slane %v288, %v292
    %295 = vmatprep.subr.mxu0 0.0
    %296 = vmatpush1.msra.mxu0 %v272
    %297 = vmatprep.subr.mxu0 0.0
    %298 = vmatpush1.msra.mxu0 %v273
    %299 = vmatprep.subr.mxu0 0.0
    %300 = vmatpush1.msra.mxu0 %v274
    %301 = vmatprep.subr.mxu0 0.0
    %302 = vmatpush1.msra.mxu0 %v275
    %303 = vmatprep.subr.mxu0 0.0
    %304 = vmatpush1.msra.mxu0 %v276
    %305 = vmatprep.subr.mxu0 0.0
    %306 = vmatpush1.msra.mxu0 %v277
    %307 = vmatprep.subr.mxu0 0.0
    %308 = vmatpush1.msra.mxu0 %v278
    %309 = vmatprep.subr.mxu0 0.0
    %310 = vmatpush1.msra.mxu0 %v279
    %311 = vmatprep.subr.mxu0 0.0
    %312 = vmatpush1.msra.mxu0 %v280
    %313 = vmatprep.subr.mxu0 0.0
    %314 = vmatpush1.msra.mxu0 %v281
    %315 = vmatprep.subr.mxu0 0.0
    %316 = vmatpush1.msra.mxu0 %v282
    %317 = vmatprep.subr.mxu0 0.0
    %318 = vmatpush1.msra.mxu0 %v283
    %319 = vmatprep.subr.mxu0 0.0
    %320 = vmatpush1.msra.mxu0 %v284
    %321 = vmatprep.subr.mxu0 0.0
    %322 = vmatpush1.msra.mxu0 %v285
    %323 = vmatprep.subr.mxu0 0.0
    %324 = vmatpush1.msra.mxu0 %v286
    %325 = vmatprep.subr.mxu0 0.0
    %326 = vmatpush1.msra.mxu0 %v287
    %327 = vmatprep.subr.mxu0 0.0
    %328 = vmatpush1.msra.mxu0 0.0
    %329 = vmatprep.subr.mxu0 0.0
    %330 = vmatpush1.msra.mxu0 0.0
    %331 = vmatprep.subr.mxu0 0.0
    %332 = vmatpush1.msra.mxu0 0.0
    %333 = vmatprep.subr.mxu0 0.0
    %334 = vmatpush1.msra.mxu0 0.0
    %335 = vmatprep.subr.mxu0 0.0
    %336 = vmatpush1.msra.mxu0 0.0
    %337 = vmatprep.subr.mxu0 0.0
    %338 = vmatpush1.msra.mxu0 0.0
    %339 = vmatprep.subr.mxu0 0.0
    %340 = vmatpush1.msra.mxu0 0.0
    %341 = vmatprep.subr.mxu0 0.0
    %342 = vmatpush1.msra.mxu0 0.0
    %343 = vmatprep.subr.mxu0 0.0
    %344 = vmatpush1.msra.mxu0 0.0
    %345 = vmatprep.subr.mxu0 0.0
    %346 = vmatpush1.msra.mxu0 0.0
    %347 = vmatprep.subr.mxu0 0.0
    %348 = vmatpush1.msra.mxu0 0.0
    %349 = vmatprep.subr.mxu0 0.0
    %350 = vmatpush1.msra.mxu0 0.0
    %351 = vmatprep.subr.mxu0 0.0
    %352 = vmatpush1.msra.mxu0 0.0
    %353 = vmatprep.subr.mxu0 0.0
    %354 = vmatpush1.msra.mxu0 0.0
    %355 = vmatprep.subr.mxu0 0.0
    %356 = vmatpush1.msra.mxu0 0.0
    %357 = vmatprep.subr.mxu0 0.0
    %358 = vmatpush1.msra.mxu0 0.0
    %359 = vmatprep.mubr.f32.mxu0 0.0
    %360 = vmatmul.mubr.f32.gmra.mrb[0].mxu0 %v271
    %v361 = vpop.f32.mrb[0].mxu0
    %v362 = vadd.f32 %v293, %v361
    %v363 = vpop.f32.mrb[0].mxu0
    %364 = vdwg.mxu0
    %vm365 = vcmask 261120
    %366 = vst.msk [vmem:[#allocation8] sm:$0xff] %vm365, %v362
    %v367 = vld [vmem:[#allocation5] sm:$0xff]
    %v368 = vld [vmem:[#allocation5 + $0x8] sm:$0xff]
    %v369 = vld [vmem:[#allocation5 + $0x10] sm:$0xff]
    %v370 = vld [vmem:[#allocation5 + $0x18] sm:$0xff]
    %v371 = vld [vmem:[#allocation5 + $0x20] sm:$0xff]
    %v372 = vld [vmem:[#allocation5 + $0x28] sm:$0xff]
    %v373 = vld [vmem:[#allocation5 + $0x30] sm:$0xff]
    %v374 = vld [vmem:[#allocation5 + $0x38] sm:$0xff]
    %v375 = vld [vmem:[#allocation5 + $0x40] sm:$0xff]
    %v376 = vld [vmem:[#allocation5 + $0x48] sm:$0xff]
    %v377 = vld [vmem:[#allocation5 + $0x50] sm:$0xff]
    %v378 = vld [vmem:[#allocation5 + $0x58] sm:$0xff]
    %v379 = vld [vmem:[#allocation5 + $0x60] sm:$0xff]
    %v380 = vld [vmem:[#allocation5 + $0x68] sm:$0xff]
    %v381 = vld [vmem:[#allocation5 + $0x70] sm:$0xff]
    %v382 = vld [vmem:[#allocation5 + $0x78] sm:$0xff]
    %v383 = vld [vmem:[%s8] sm:$0x1]
    %v385 = vlaneseq
    %v386 = vshrl.u32 %v385, 7
    %v387 = vsub.s32 0, %v386
    %v388 = vrot.slane %v383, %v387
    %390 = vmatprep.subr.mxu0 0.0
    %391 = vmatpush1.msra.mxu0 %v367
    %392 = vmatprep.subr.mxu0 0.0
    %393 = vmatpush1.msra.mxu0 %v368
    %394 = vmatprep.subr.mxu0 0.0
    %395 = vmatpush1.msra.mxu0 %v369
    %396 = vmatprep.subr.mxu0 0.0
    %397 = vmatpush1.msra.mxu0 %v370
    %398 = vmatprep.subr.mxu0 0.0
    %399 = vmatpush1.msra.mxu0 %v371
    %400 = vmatprep.subr.mxu0 0.0
    %401 = vmatpush1.msra.mxu0 %v372
    %402 = vmatprep.subr.mxu0 0.0
    %403 = vmatpush1.msra.mxu0 %v373
    %404 = vmatprep.subr.mxu0 0.0
    %405 = vmatpush1.msra.mxu0 %v374
    %406 = vmatprep.subr.mxu0 0.0
    %407 = vmatpush1.msra.mxu0 %v375
    %408 = vmatprep.subr.mxu0 0.0
    %409 = vmatpush1.msra.mxu0 %v376
    %410 = vmatprep.subr.mxu0 0.0
    %411 = vmatpush1.msra.mxu0 %v377
    %412 = vmatprep.subr.mxu0 0.0
    %413 = vmatpush1.msra.mxu0 %v378
    %414 = vmatprep.subr.mxu0 0.0
    %415 = vmatpush1.msra.mxu0 %v379
    %416 = vmatprep.subr.mxu0 0.0
    %417 = vmatpush1.msra.mxu0 %v380
    %418 = vmatprep.subr.mxu0 0.0
    %419 = vmatpush1.msra.mxu0 %v381
    %420 = vmatprep.subr.mxu0 0.0
    %421 = vmatpush1.msra.mxu0 %v382
    %422 = vmatprep.subr.mxu0 0.0
    %423 = vmatpush1.msra.mxu0 0.0
    %424 = vmatprep.subr.mxu0 0.0
    %425 = vmatpush1.msra.mxu0 0.0
    %426 = vmatprep.subr.mxu0 0.0
    %427 = vmatpush1.msra.mxu0 0.0
    %428 = vmatprep.subr.mxu0 0.0
    %429 = vmatpush1.msra.mxu0 0.0
    %430 = vmatprep.subr.mxu0 0.0
    %431 = vmatpush1.msra.mxu0 0.0
    %432 = vmatprep.subr.mxu0 0.0
    %433 = vmatpush1.msra.mxu0 0.0
    %434 = vmatprep.subr.mxu0 0.0
    %435 = vmatpush1.msra.mxu0 0.0
    %436 = vmatprep.subr.mxu0 0.0
    %437 = vmatpush1.msra.mxu0 0.0
    %438 = vmatprep.subr.mxu0 0.0
    %439 = vmatpush1.msra.mxu0 0.0
    %440 = vmatprep.subr.mxu0 0.0
    %441 = vmatpush1.msra.mxu0 0.0
    %442 = vmatprep.subr.mxu0 0.0
    %443 = vmatpush1.msra.mxu0 0.0
    %444 = vmatprep.subr.mxu0 0.0
    %445 = vmatpush1.msra.mxu0 0.0
    %446 = vmatprep.subr.mxu0 0.0
    %447 = vmatpush1.msra.mxu0 0.0
    %448 = vmatprep.subr.mxu0 0.0
    %449 = vmatpush1.msra.mxu0 0.0
    %450 = vmatprep.subr.mxu0 0.0
    %451 = vmatpush1.msra.mxu0 0.0
    %452 = vmatprep.subr.mxu0 0.0
    %453 = vmatpush1.msra.mxu0 0.0
    %454 = vmatprep.mubr.f32.mxu0 0.0
    %455 = vmatmul.mubr.f32.gmra.mrb[0].mxu0 %v271
    %v456 = vpop.f32.mrb[0].mxu0
    %v457 = vadd.f32 %v388, %v456
    %v458 = vpop.f32.mrb[0].mxu0
    %459 = vdwg.mxu0
    %v460 = vmax.f32 %v457, 0.0
    %v461 = vld [vmem:[#allocation7] sm:$0xff]
    %v462 = vld [vmem:[#allocation7 + $0x8] sm:$0xff]
    %v463 = vld [vmem:[#allocation7 + $0x10] sm:$0xff]
    %v464 = vld [vmem:[#allocation7 + $0x18] sm:$0xff]
    %v465 = vld [vmem:[#allocation7 + $0x20] sm:$0xff]
    %v466 = vld [vmem:[#allocation7 + $0x28] sm:$0xff]
    %v467 = vld [vmem:[#allocation7 + $0x30] sm:$0xff]
    %v468 = vld [vmem:[#allocation7 + $0x38] sm:$0xff]
    %v469 = vld [vmem:[#allocation7 + $0x40] sm:$0xff]
    %v470 = vld [vmem:[#allocation7 + $0x48] sm:$0xff]
    %v471 = vld [vmem:[#allocation7 + $0x50] sm:$0xff]
    %v472 = vld [vmem:[#allocation7 + $0x58] sm:$0xff]
    %v473 = vld [vmem:[#allocation7 + $0x60] sm:$0xff]
    %v474 = vld [vmem:[#allocation7 + $0x68] sm:$0xff]
    %v475 = vld [vmem:[#allocation7 + $0x70] sm:$0xff]
    %v476 = vld [vmem:[#allocation7 + $0x78] sm:$0xff]
    %v477 = vld [vmem:[%s10] sm:$0x1]
    %v479 = vlaneseq
    %v480 = vshrl.u32 %v479, 7
    %v481 = vsub.s32 0, %v480
    %v482 = vrot.slane %v477, %v481
    %484 = vmatprep.subr.mxu0 0.0
    %485 = vmatpush1.msra.mxu0 %v461
    %486 = vmatprep.subr.mxu0 0.0
    %487 = vmatpush1.msra.mxu0 %v462
    %488 = vmatprep.subr.mxu0 0.0
    %489 = vmatpush1.msra.mxu0 %v463
    %490 = vmatprep.subr.mxu0 0.0
    %491 = vmatpush1.msra.mxu0 %v464
    %492 = vmatprep.subr.mxu0 0.0
    %493 = vmatpush1.msra.mxu0 %v465
    %494 = vmatprep.subr.mxu0 0.0
    %495 = vmatpush1.msra.mxu0 %v466
    %496 = vmatprep.subr.mxu0 0.0
    %497 = vmatpush1.msra.mxu0 %v467
    %498 = vmatprep.subr.mxu0 0.0
    %499 = vmatpush1.msra.mxu0 %v468
    %500 = vmatprep.subr.mxu0 0.0
    %501 = vmatpush1.msra.mxu0 %v469
    %502 = vmatprep.subr.mxu0 0.0
    %503 = vmatpush1.msra.mxu0 %v470
    %504 = vmatprep.subr.mxu0 0.0
    %505 = vmatpush1.msra.mxu0 %v471
    %506 = vmatprep.subr.mxu0 0.0
    %507 = vmatpush1.msra.mxu0 %v472
    %508 = vmatprep.subr.mxu0 0.0
    %509 = vmatpush1.msra.mxu0 %v473
    %510 = vmatprep.subr.mxu0 0.0
    %511 = vmatpush1.msra.mxu0 %v474
    %512 = vmatprep.subr.mxu0 0.0
    %513 = vmatpush1.msra.mxu0 %v475
    %514 = vmatprep.subr.mxu0 0.0
    %515 = vmatpush1.msra.mxu0 %v476
    %516 = vmatprep.subr.mxu0 0.0
    %517 = vmatpush1.msra.mxu0 0.0
    %518 = vmatprep.subr.mxu0 0.0
    %519 = vmatpush1.msra.mxu0 0.0
    %520 = vmatprep.subr.mxu0 0.0
    %521 = vmatpush1.msra.mxu0 0.0
    %522 = vmatprep.subr.mxu0 0.0
    %523 = vmatpush1.msra.mxu0 0.0
    %524 = vmatprep.subr.mxu0 0.0
    %525 = vmatpush1.msra.mxu0 0.0
    %526 = vmatprep.subr.mxu0 0.0
    %527 = vmatpush1.msra.mxu0 0.0
    %528 = vmatprep.subr.mxu0 0.0
    %529 = vmatpush1.msra.mxu0 0.0
    %530 = vmatprep.subr.mxu0 0.0
    %531 = vmatpush1.msra.mxu0 0.0
    %532 = vmatprep.subr.mxu0 0.0
    %533 = vmatpush1.msra.mxu0 0.0
    %534 = vmatprep.subr.mxu0 0.0
    %535 = vmatpush1.msra.mxu0 0.0
    %536 = vmatprep.subr.mxu0 0.0
    %537 = vmatpush1.msra.mxu0 0.0
    %538 = vmatprep.subr.mxu0 0.0
    %539 = vmatpush1.msra.mxu0 0.0
    %540 = vmatprep.subr.mxu0 0.0
    %541 = vmatpush1.msra.mxu0 0.0
    %542 = vmatprep.subr.mxu0 0.0
    %543 = vmatpush1.msra.mxu0 0.0
    %544 = vmatprep.subr.mxu0 0.0
    %545 = vmatpush1.msra.mxu0 0.0
    %546 = vmatprep.subr.mxu0 0.0
    %547 = vmatpush1.msra.mxu0 0.0
    %548 = vmatprep.mubr.f32.mxu0 0.0
    %549 = vmatmul.mubr.f32.gmra.mrb[0].mxu0 %v460
    %v550 = vpop.f32.mrb[0].mxu0
    %v551 = vadd.f32 %v482, %v550
    %v552 = vpop.f32.mrb[0].mxu0
    %553 = vdwg.mxu0
    %554 = vst [vmem:[#allocation9] sm:$0xff] %v551
    // Predicated region
    $region58: #{tpu_custom_call.1} parent=1 // pred_check
      _
    $region59: #{tpu_custom_call.1} parent=1 // pred_check_branch
      %556 = sbr.rel (0) target = $region61
    $region60: #{tpu_custom_call.1} parent=1 // pred_region
      %s558 = ssub.s32 128, 128
      %559 = vsyncadd [#allocation4], %s558
      %s561 = sshll.u32 [#allocation8], 4
      %s562 = int_to_ptr.vmem [resolvable:$true] %s561
      %564 = dma.vmem_to_hbm [thread:$0]  %s562, 128, %s11, [#allocation4]
    $region61: #{tpu_custom_call.1} parent=1 // pred_fallthru
      _
    // Predicated region
    $region62: #{tpu_custom_call.1} parent=1 // pred_check
      _
    $region63: #{tpu_custom_call.1} parent=1 // pred_check_branch
      %566 = sbr.rel (0) target = $region65
    $region64: #{tpu_custom_call.1} parent=1 // pred_region
      %s568 = ssub.s32 128, 128
      %569 = vsyncadd [#allocation10], %s568
      %s571 = sshll.u32 [#allocation9], 4
      %s572 = int_to_ptr.vmem [resolvable:$true] %s571
      %574 = dma.vmem_to_hbm [thread:$0]  %s572, 128, %s12, [#allocation10]
    $region65: #{tpu_custom_call.1} parent=1 // pred_fallthru
      _
    // Predicated region
    $region66: #{tpu_custom_call.1} parent=1 // pred_check
      _
    $region67: #{tpu_custom_call.1} parent=1 // pred_check_branch
      %576 = sbr.rel (0) target = $region69
    $region68: #{tpu_custom_call.1} parent=1 // pred_region
      %577 = dma.done [#allocation4], 128
    $region69: #{tpu_custom_call.1} parent=1 // pred_fallthru
      _
    // Predicated region
    $region70: #{tpu_custom_call.1} parent=1 // pred_check
      _
    $region71: #{tpu_custom_call.1} parent=1 // pred_check_branch
      %579 = sbr.rel (0) target = $region73
    $region72: #{tpu_custom_call.1} parent=1 // pred_region
      %580 = dma.done [#allocation10], 128
    $region73: #{tpu_custom_call.1} parent=1 // pred_fallthru
      _
    %581 = vsyncpa [#allocation3], 1
    %582 = vsyncpa [#allocation6], 1
    %583 = vsyncpa [#allocation4], 1
    %584 = vsyncpa [#allocation10], 1

</llo_original>
